<compile_context>
chip_gen: v6e
topology: v6e:2x2x1
jax: 0.10.0
libtpu: 0.0.40
codegen_flags: <defaults>
</compile_context>

<pallas_src>
import functools

import jax
import jax.numpy as jnp
from jax.experimental import pallas as pl
from jax.experimental.pallas import tpu as pltpu

_ALIGN_M = 16  # sublane alignment for the batch tile (covers f32 and bf16 packing)


def _round_up(x, m):
    return (x + m - 1) // m * m


def _pad_to(a, shape):
    pads = [(0, s - d) for d, s in zip(a.shape, shape)]
    if any(p[1] for p in pads):
        return jnp.pad(a, pads)
    return a


def mlp_kernel(x_ref, w1_ref, b1_ref, w2_ref, b2_ref, w3_ref, b3_ref, out_ref):
    """Fused hot path for one batch tile: 3 MXU matmuls + f32 bias adds + 2 ReLUs in VMEM."""
    cdt = w1_ref.dtype  # compute dtype of the matmul operands (f32, or bf16 on v6e/v7x)

    h1 = jnp.dot(x_ref[...], w1_ref[...], preferred_element_type=jnp.float32)
    h1 = jnp.maximum(h1 + b1_ref[...], 0.0)                      # bias + ReLU in f32

    h2 = jnp.dot(h1.astype(cdt), w2_ref[...], preferred_element_type=jnp.float32)
    h2 = jnp.maximum(h2 + b2_ref[...], 0.0)                      # bias + ReLU in f32

    out = jnp.dot(h2.astype(cdt), w3_ref[...], preferred_element_type=jnp.float32)
    out_ref[...] = (out + b3_ref[...]).astype(out_ref.dtype)


def prepare_params(params, compute_dtype=jnp.float32):
    """One-time preparation (NOT per forward call):
      * weights [in, out]: pad `out` dims (fc1/fc2/n_actions) to multiples of 128 and cast to
        compute_dtype.  The input-feature dim of w1 is left unpadded (matches the unpadded
        activation block).
      * biases [1, out]: pad to multiples of 128, kept in f32 (bias-add/ReLU run in f32).
    """
    w1, b1, w2, b2, w3, b3 = (params[k] for k in ("w1", "b1", "w2", "b2", "w3", "b3"))
    d_in, d1 = w1.shape
    d2, d_out = w2.shape[1], w3.shape[1]
    D1, D2, DO = _round_up(d1, 128), _round_up(d2, 128), _round_up(d_out, 128)
    return {
        "w1": _pad_to(w1, (d_in, D1)).astype(compute_dtype),
        "b1": _pad_to(b1, (1, D1)).astype(jnp.float32),
        "w2": _pad_to(w2, (D1, D2)).astype(compute_dtype),
        "b2": _pad_to(b2, (1, D2)).astype(jnp.float32),
        "w3": _pad_to(w3, (D2, DO)).astype(compute_dtype),
        "b3": _pad_to(b3, (1, DO)).astype(jnp.float32),
    }


@functools.partial(jax.jit, static_argnames=("n_actions", "tile_m"))
def deep_neural_net_forward(state, prepared, *, n_actions, tile_m=512):
    """state: [B, input_dim] f32.  prepared: output of prepare_params().  Returns [B, n_actions] f32."""
    w1, b1, w2, b2, w3, b3 = (prepared[k] for k in ("w1", "b1", "w2", "b2", "w3", "b3"))
    B, d_in = state.shape
    D1, D2, DO = w1.shape[1], w2.shape[1], w3.shape[1]
    cdt = w1.dtype

    # Batch tile: multiple of 16, capped at tile_m; use >= 2 tiles whenever possible so the
    # "parallel" batch axis shards across both TensorCores on v7x.
    if B <= _ALIGN_M:
        TM = _ALIGN_M
    else:
        TM = min(tile_m, _round_up(-(-B // 2), _ALIGN_M))
    Bp = _round_up(B, TM)
    grid = (Bp // TM,)

    # Cast activations once in the wrapper (no-op for f32; halves DMA traffic for bf16),
    # pad only the batch rows if the grid does not divide evenly.  No feature-dim padding.
    x_p = _pad_to(state.astype(cdt), (Bp, d_in))

    flops = 2 * B * (d_in * D1 + D1 * D2 + D2 * DO)
    ins = (x_p, w1, b1, w2, b2, w3, b3)
    bytes_accessed = sum(a.size * a.dtype.itemsize for a in ins) + Bp * DO * 4

    out_p = pl.pallas_call(
        mlp_kernel,
        out_shape=jax.ShapeDtypeStruct((Bp, DO), jnp.float32),
        grid=grid,
        in_specs=[
            # Activations: tiled over batch, full (unpadded) feature dim; double-buffered.
            pl.BlockSpec((TM, d_in), lambda i: (i, 0)),
            # Weights / biases: same block every grid step -> DMA'd once, VMEM-resident.
            pl.BlockSpec((d_in, D1), lambda i: (0, 0)),
            pl.BlockSpec((1, D1), lambda i: (0, 0)),
            pl.BlockSpec((D1, D2), lambda i: (0, 0)),
            pl.BlockSpec((1, D2), lambda i: (0, 0)),
            pl.BlockSpec((D2, DO), lambda i: (0, 0)),
            pl.BlockSpec((1, DO), lambda i: (0, 0)),
        ],
        out_specs=pl.BlockSpec((TM, DO), lambda i: (i, 0)),
        compiler_params=pltpu.CompilerParams(
            dimension_semantics=("parallel",),   # 2 TCs on v7x; harmless on v5e/v6e
        ),
        cost_estimate=pl.CostEstimate(
            flops=flops, transcendentals=0, bytes_accessed=bytes_accessed),
    )(*ins)

    if Bp == B and DO == n_actions:
        return out_p
    return out_p[:B, :n_actions]


def init_params(key, input_dim, fc1_dims, fc2_dims, n_actions):
    """Deterministic init mimicking nn.Linear's default U(-1/sqrt(fan_in), 1/sqrt(fan_in)).
    Weights stored as [in, out] (transposed vs. PyTorch's [out, in]) so the kernel is x @ W + b."""
    def linear(k, fan_in, fan_out):
        kw, kb = jax.random.split(k)
        bound = 1.0 / jnp.sqrt(jnp.float32(fan_in))
        w = jax.random.uniform(kw, (fan_in, fan_out), jnp.float32, -bound, bound)
        b = jax.random.uniform(kb, (1, fan_out), jnp.float32, -bound, bound)
        return w, b

    k1, k2, k3 = jax.random.split(key, 3)
    w1, b1 = linear(k1, input_dim, fc1_dims)
    w2, b2 = linear(k2, fc1_dims, fc2_dims)
    w3, b3 = linear(k3, fc2_dims, n_actions)
    return {"w1": w1, "b1": b1, "w2": w2, "b2": b2, "w3": w3, "b3": b3}


def reference_forward(state, p):
    h1 = jnp.maximum(state @ p["w1"] + p["b1"], 0.0)
    h2 = jnp.maximum(h1 @ p["w2"] + p["b2"], 0.0)
    return h2 @ p["w3"] + p["b3"]


if __name__ == "__main__":
    # Small shapes consistent with the module's forward:
    # input_dims=(16,), fc1_dims=32, fc2_dims=32, n_actions=4, batch=2
    batch, input_dim, fc1_dims, fc2_dims, n_actions = 2, 16, 32, 32, 4

    key = jax.random.PRNGKey(0)
    k_state, k_params, k_big = jax.random.split(key, 3)
    state = jax.random.normal(k_state, (batch, input_dim), jnp.float32)
    params = init_params(k_params, input_dim, fc1_dims, fc2_dims, n_actions)

    # One-time weight preparation (padding + casting happens here, not per call).
    prepared_f32 = prepare_params(params, compute_dtype=jnp.float32)

    # Small-batch run (single tile, padded to 16 rows internally).
    actions = jax.block_until_ready(
        deep_neural_net_forward(state, prepared_f32, n_actions=n_actions))
    ref = reference_forward(state, params)
    assert actions.shape == (batch, n_actions)
    assert jnp.allclose(actions, ref, atol=1e-5, rtol=1e-5)

    # Batched run exercising the real batch grid (>=2 tiles, VMEM-resident weights).
    big_state = jax.random.normal(k_big, (1000, input_dim), jnp.float32)
    big_actions = jax.block_until_ready(
        deep_neural_net_forward(big_state, prepared_f32, n_actions=n_actions))
    big_ref = reference_forward(big_state, params)
    assert big_actions.shape == (1000, n_actions)
    assert jnp.allclose(big_actions, big_ref, atol=1e-4, rtol=1e-4)

    # bf16-operand path (intended default on v6e/v7x): matmuls still accumulate in f32,
    # so compare against the f32 reference with bf16-appropriate tolerances.
    prepared_bf16 = prepare_params(params, compute_dtype=jnp.bfloat16)
    bf16_actions = jax.block_until_ready(
        deep_neural_net_forward(big_state, prepared_bf16, n_actions=n_actions))
    assert bf16_actions.shape == (1000, n_actions)
    assert jnp.allclose(bf16_actions, big_ref, atol=5e-2, rtol=5e-2)

    # TODO(synk): the Adam optimizer, MSELoss, and the perf_counter_ns print in forward() are
    # training/host-side concerns with no Pallas forward-pass equivalent; only forward compute
    # is implemented here.
    print("KERNEL_OK")
</pallas_src>

<mosaic_0001>
module attributes {stable_mosaic.version = 11 : i64} {
  func.func @mlp_kernel(%arg0: i32, %arg1: memref<16x16xf32, #tpu.memory_space<vmem>>, %arg2: memref<16x128xf32, #tpu.memory_space<vmem>>, %arg3: memref<1x128xf32, #tpu.memory_space<vmem>>, %arg4: memref<128x128xf32, #tpu.memory_space<vmem>>, %arg5: memref<1x128xf32, #tpu.memory_space<vmem>>, %arg6: memref<128x128xf32, #tpu.memory_space<vmem>>, %arg7: memref<1x128xf32, #tpu.memory_space<vmem>>, %arg8: memref<16x128xf32, #tpu.memory_space<vmem>>) attributes {dimension_semantics = [#tpu.dimension_semantics<parallel>], iteration_bounds = array<i64: 1>, scalar_prefetch = 0 : i64, scratch_operands = 0 : i64, tpu.core_type = #tpu.core_type<tc>, window_params = [{transform_indices = @transform_0, window_bounds = array<i64: 16, 16>}, {pipeline_mode = #tpu.pipeline_mode<synchronous>, transform_indices = @transform_1, window_bounds = array<i64: 16, 128>}, {pipeline_mode = #tpu.pipeline_mode<synchronous>, transform_indices = @transform_2, window_bounds = array<i64: 1, 128>}, {pipeline_mode = #tpu.pipeline_mode<synchronous>, transform_indices = @transform_3, window_bounds = array<i64: 128, 128>}, {pipeline_mode = #tpu.pipeline_mode<synchronous>, transform_indices = @transform_4, window_bounds = array<i64: 1, 128>}, {pipeline_mode = #tpu.pipeline_mode<synchronous>, transform_indices = @transform_5, window_bounds = array<i64: 128, 128>}, {pipeline_mode = #tpu.pipeline_mode<synchronous>, transform_indices = @transform_6, window_bounds = array<i64: 1, 128>}, {transform_indices = @transform_7, window_bounds = array<i64: 16, 128>}]} {
    %c0 = arith.constant 0 : index
    %c0_0 = arith.constant 0 : index
    %0 = vector.load %arg1[%c0, %c0_0] : memref<16x16xf32, #tpu.memory_space<vmem>>, vector<16x16xf32>
    %c0_1 = arith.constant 0 : index
    %c0_2 = arith.constant 0 : index
    %1 = vector.load %arg2[%c0_1, %c0_2] : memref<16x128xf32, #tpu.memory_space<vmem>>, vector<16x128xf32>
    %cst = arith.constant dense<0.000000e+00> : vector<16x128xf32>
    %2 = tpu.matmul %0, %1, %cst {dimension_numbers = #tpu.dot_dimension_numbers<[1], [0], [0], [1], [0, 0, 1, 1], [], []>} : vector<16x16xf32>, vector<16x128xf32>, vector<16x128xf32> -> vector<16x128xf32>
    %c0_3 = arith.constant 0 : index
    %c0_4 = arith.constant 0 : index
    %3 = vector.load %arg3[%c0_3, %c0_4] : memref<1x128xf32, #tpu.memory_space<vmem>>, vector<1x128xf32>
    %4 = vector.broadcast %3 : vector<1x128xf32> to vector<16x128xf32>
    %5 = arith.addf %2, %4 : vector<16x128xf32>
    %cst_5 = arith.constant 0.000000e+00 : f32
    %6 = vector.broadcast %cst_5 : f32 to vector<16x128xf32>
    %7 = arith.maximumf %5, %6 : vector<16x128xf32>
    %c0_6 = arith.constant 0 : index
    %c0_7 = arith.constant 0 : index
    %8 = vector.load %arg4[%c0_6, %c0_7] : memref<128x128xf32, #tpu.memory_space<vmem>>, vector<128x128xf32>
    %cst_8 = arith.constant dense<0.000000e+00> : vector<16x128xf32>
    %9 = tpu.matmul %7, %8, %cst_8 {dimension_numbers = #tpu.dot_dimension_numbers<[1], [0], [0], [1], [0, 0, 1, 1], [], []>} : vector<16x128xf32>, vector<128x128xf32>, vector<16x128xf32> -> vector<16x128xf32>
    %c0_9 = arith.constant 0 : index
    %c0_10 = arith.constant 0 : index
    %10 = vector.load %arg5[%c0_9, %c0_10] : memref<1x128xf32, #tpu.memory_space<vmem>>, vector<1x128xf32>
    %11 = vector.broadcast %10 : vector<1x128xf32> to vector<16x128xf32>
    %12 = arith.addf %9, %11 : vector<16x128xf32>
    %cst_11 = arith.constant 0.000000e+00 : f32
    %13 = vector.broadcast %cst_11 : f32 to vector<16x128xf32>
    %14 = arith.maximumf %12, %13 : vector<16x128xf32>
    %c0_12 = arith.constant 0 : index
    %c0_13 = arith.constant 0 : index
    %15 = vector.load %arg6[%c0_12, %c0_13] : memref<128x128xf32, #tpu.memory_space<vmem>>, vector<128x128xf32>
    %cst_14 = arith.constant dense<0.000000e+00> : vector<16x128xf32>
    %16 = tpu.matmul %14, %15, %cst_14 {dimension_numbers = #tpu.dot_dimension_numbers<[1], [0], [0], [1], [0, 0, 1, 1], [], []>} : vector<16x128xf32>, vector<128x128xf32>, vector<16x128xf32> -> vector<16x128xf32>
    %c0_15 = arith.constant 0 : index
    %c0_16 = arith.constant 0 : index
    %17 = vector.load %arg7[%c0_15, %c0_16] : memref<1x128xf32, #tpu.memory_space<vmem>>, vector<1x128xf32>
    %18 = vector.broadcast %17 : vector<1x128xf32> to vector<16x128xf32>
    %19 = arith.addf %16, %18 : vector<16x128xf32>
    %c0_17 = arith.constant 0 : index
    %c0_18 = arith.constant 0 : index
    %20 = vector.load %arg8[%c0_17, %c0_18] : memref<16x128xf32, #tpu.memory_space<vmem>>, vector<16x128xf32>
    tpu.vector_store %arg8[%c0_17, %c0_18], %19 {strides = array<i32>} : memref<16x128xf32, #tpu.memory_space<vmem>>, vector<16x128xf32>,
    return
  }
  func.func @transform_0(%arg0: i32) -> (i32, i32) {
    %c0_i32 = arith.constant 0 : i32
    %c0_i32_0 = arith.constant 0 : i32
    return %arg0, %c0_i32 : i32, i32
  }
  func.func @transform_1(%arg0: i32) -> (i32, i32) {
    %c0_i32 = arith.constant 0 : i32
    %c0_i32_0 = arith.constant 0 : i32
    %c0_i32_1 = arith.constant 0 : i32
    return %c0_i32, %c0_i32_0 : i32, i32
  }
  func.func @transform_2(%arg0: i32) -> (i32, i32) {
    %c0_i32 = arith.constant 0 : i32
    %c0_i32_0 = arith.constant 0 : i32
    %c0_i32_1 = arith.constant 0 : i32
    return %c0_i32, %c0_i32_0 : i32, i32
  }
  func.func @transform_3(%arg0: i32) -> (i32, i32) {
    %c0_i32 = arith.constant 0 : i32
    %c0_i32_0 = arith.constant 0 : i32
    %c0_i32_1 = arith.constant 0 : i32
    return %c0_i32, %c0_i32_0 : i32, i32
  }
  func.func @transform_4(%arg0: i32) -> (i32, i32) {
    %c0_i32 = arith.constant 0 : i32
    %c0_i32_0 = arith.constant 0 : i32
    %c0_i32_1 = arith.constant 0 : i32
    return %c0_i32, %c0_i32_0 : i32, i32
  }
  func.func @transform_5(%arg0: i32) -> (i32, i32) {
    %c0_i32 = arith.constant 0 : i32
    %c0_i32_0 = arith.constant 0 : i32
    %c0_i32_1 = arith.constant 0 : i32
    return %c0_i32, %c0_i32_0 : i32, i32
  }
  func.func @transform_6(%arg0: i32) -> (i32, i32) {
    %c0_i32 = arith.constant 0 : i32
    %c0_i32_0 = arith.constant 0 : i32
    %c0_i32_1 = arith.constant 0 : i32
    return %c0_i32, %c0_i32_0 : i32, i32
  }
  func.func @transform_7(%arg0: i32) -> (i32, i32) {
    %c0_i32 = arith.constant 0 : i32
    %c0_i32_0 = arith.constant 0 : i32
    return %arg0, %c0_i32 : i32, i32
  }
}

</mosaic_0001>

<llo_original>
// kernel: deep_neural_net_forward.1
$region0: #{deep_neural_net_forward.1}
  #allocation0 [shape = 'u32[]', space=smem, size = 0x4, offset = 0x4, fixed_abs, tag = 'smem constant byte address 0x4 - core index']
  #allocation1 [shape = 'u32[144,128]{1,0:T(1,128)}', space=vmem, size = 0x12000, scoped, tag = 'internal scratch']
  %s0 = inlined_call_operand.vmem [shape: f32[16,16], index: 0, kind: input, shape index: {}]
  %s1 = inlined_call_operand.vmem [shape: f32[16,128], index: 1, kind: input, shape index: {}]
  %s2 = inlined_call_operand.vmem [shape: f32[1,128], index: 2, kind: input, shape index: {}]
  %s3 = inlined_call_operand.hbm [shape: f32[128,128], index: 3, kind: input, shape index: {}]
  %s4 = inlined_call_operand.vmem [shape: f32[1,128], index: 4, kind: input, shape index: {}]
  %s5 = inlined_call_operand.hbm [shape: f32[128,128], index: 5, kind: input, shape index: {}]
  %s6 = inlined_call_operand.vmem [shape: f32[1,128], index: 6, kind: input, shape index: {}]
  %s7 = inlined_call_operand.vmem [shape: f32[16,128], index: 7, kind: output, shape index: {}]
  %s8 = sld [smem:[#allocation0]]
  $region46: #{deep_neural_net_forward.1} parent=0
    _
  %s10 = ssub.s32 1, %s8
  %s11 = scalar_select 0, %s10, %s8
  $region1: #{deep_neural_net_forward.1} parent=0
    #allocation2 [shape = 'u8[65536]{0}', space=vmem, size = 0x10000, scoped, tag = 'input window, operand 3, single buffered']
    #allocation3 [shape = 's32[1]{0}', space=sflag, size = 0x4, scoped, tag = 'scoped memory for deep_neural_net_forward.1']
    #allocation4 [shape = 'u8[65536]{0}', space=vmem, size = 0x10000, scoped, tag = 'input window, operand 5, single buffered']
    #allocation5 [shape = 's32[1]{0}', space=sflag, size = 0x4, scoped, tag = 'scoped memory for deep_neural_net_forward.1']
    %12 = vsyncpa [#allocation3], 0
    %13 = vsyncpa [#allocation5], 0
    // Predicated region
    $region2: #{deep_neural_net_forward.1} parent=1 // pred_check
      _
    $region3: #{deep_neural_net_forward.1} parent=1 // pred_check_branch
      %15 = sbr.rel (0) target = $region5
    $region4: #{deep_neural_net_forward.1} parent=1 // pred_region
      _
    $region5: #{deep_neural_net_forward.1} parent=1 // pred_fallthru
      _
    // Predicated region
    $region6: #{deep_neural_net_forward.1} parent=1 // pred_check
      _
    $region7: #{deep_neural_net_forward.1} parent=1 // pred_check_branch
      %17 = sbr.rel (0) target = $region9
    $region8: #{deep_neural_net_forward.1} parent=1 // pred_region
      _
    $region9: #{deep_neural_net_forward.1} parent=1 // pred_fallthru
      _
    // Predicated region
    $region10: #{deep_neural_net_forward.1} parent=1 // pred_check
      _
    $region11: #{deep_neural_net_forward.1} parent=1 // pred_check_branch
      %19 = sbr.rel (0) target = $region13
    $region12: #{deep_neural_net_forward.1} parent=1 // pred_region
      _
    $region13: #{deep_neural_net_forward.1} parent=1 // pred_fallthru
      _
    // Predicated region
    $region14: #{deep_neural_net_forward.1} parent=1 // pred_check
      _
    $region15: #{deep_neural_net_forward.1} parent=1 // pred_check_branch
      %21 = sbr.rel (0) target = $region17
    $region16: #{deep_neural_net_forward.1} parent=1 // pred_region
      %s23 = ssub.s32 2048, 2048
      %24 = vsyncadd [#allocation3], %s23
      %s25 = sshll.u32 [#allocation2], 4
      %s26 = int_to_ptr.vmem [resolvable:$true] %s25
      %31 = dma.hbm_to_vmem [thread:$0]  %s3, 2048, %s26, [#allocation3], 128, 128, 8
    $region17: #{deep_neural_net_forward.1} parent=1 // pred_fallthru
      _
    // Predicated region
    $region18: #{deep_neural_net_forward.1} parent=1 // pred_check
      _
    $region19: #{deep_neural_net_forward.1} parent=1 // pred_check_branch
      %33 = sbr.rel (0) target = $region21
    $region20: #{deep_neural_net_forward.1} parent=1 // pred_region
      _
    $region21: #{deep_neural_net_forward.1} parent=1 // pred_fallthru
      _
    // Predicated region
    $region22: #{deep_neural_net_forward.1} parent=1 // pred_check
      _
    $region23: #{deep_neural_net_forward.1} parent=1 // pred_check_branch
      %35 = sbr.rel (0) target = $region25
    $region24: #{deep_neural_net_forward.1} parent=1 // pred_region
      %s37 = ssub.s32 2048, 2048
      %38 = vsyncadd [#allocation5], %s37
      %s39 = sshll.u32 [#allocation4], 4
      %s40 = int_to_ptr.vmem [resolvable:$true] %s39
      %45 = dma.hbm_to_vmem [thread:$0]  %s5, 2048, %s40, [#allocation5], 128, 128, 8
    $region25: #{deep_neural_net_forward.1} parent=1 // pred_fallthru
      _
    // Predicated region
    $region26: #{deep_neural_net_forward.1} parent=1 // pred_check
      _
    $region27: #{deep_neural_net_forward.1} parent=1 // pred_check_branch
      %47 = sbr.rel (0) target = $region29
    $region28: #{deep_neural_net_forward.1} parent=1 // pred_region
      _
    $region29: #{deep_neural_net_forward.1} parent=1 // pred_fallthru
      _
    // Predicated region
    $region30: #{deep_neural_net_forward.1} parent=1 // pred_check
      _
    $region31: #{deep_neural_net_forward.1} parent=1 // pred_check_branch
      %49 = sbr.rel (0) target = $region33
    $region32: #{deep_neural_net_forward.1} parent=1 // pred_region
      %50 = dma.done [#allocation3], 2048
    $region33: #{deep_neural_net_forward.1} parent=1 // pred_fallthru
      _
    // Predicated region
    $region34: #{deep_neural_net_forward.1} parent=1 // pred_check
      _
    $region35: #{deep_neural_net_forward.1} parent=1 // pred_check_branch
      %52 = sbr.rel (0) target = $region37
    $region36: #{deep_neural_net_forward.1} parent=1 // pred_region
      %53 = dma.done [#allocation5], 2048
    $region37: #{deep_neural_net_forward.1} parent=1 // pred_fallthru
      _
    %v54 = vld [vmem:[%s0] sm:$0xff]
    %v55 = vld [vmem:[%s0 + $0x8] sm:$0xff]
    %v56 = vld [vmem:[%s1] sm:$0xff]
    %v57 = vld [vmem:[%s1 + $0x8] sm:$0xff]
    %v58 = vld [vmem:[%s2] sm:$0x1]
    %v60 = vlaneseq
    %v61 = vshrl.u32 %v60, 7
    %v62 = vsub.s32 0, %v61
    %v63 = vrot.slane %v58, %v62
    %vm65 = vcmask 130048
    %v67 = vsel %vm65, %v54, 0
    %v70 = vsel %vm65, %v55, 0
    %72 = vmatprep.subr.mxu0 0.0
    %73 = vmatpush1.msra.mxu0 0.0
    %74 = vmatprep.subr.mxu0 0.0
    %75 = vmatpush1.msra.mxu0 0.0
    %76 = vmatprep.subr.mxu0 0.0
    %77 = vmatpush1.msra.mxu0 0.0
    %78 = vmatprep.subr.mxu0 0.0
    %79 = vmatpush1.msra.mxu0 0.0
    %80 = vmatprep.subr.mxu0 0.0
    %81 = vmatpush1.msra.mxu0 0.0
    %82 = vmatprep.subr.mxu0 0.0
    %83 = vmatpush1.msra.mxu0 0.0
    %84 = vmatprep.subr.mxu0 0.0
    %85 = vmatpush1.msra.mxu0 0.0
    %86 = vmatprep.subr.mxu0 0.0
    %87 = vmatpush1.msra.mxu0 0.0
    %88 = vmatprep.subr.mxu0 0.0
    %89 = vmatpush1.msra.mxu0 0.0
    %90 = vmatprep.subr.mxu0 0.0
    %91 = vmatpush1.msra.mxu0 0.0
    %92 = vmatprep.subr.mxu0 0.0
    %93 = vmatpush1.msra.mxu0 0.0
    %94 = vmatprep.subr.mxu0 0.0
    %95 = vmatpush1.msra.mxu0 0.0
    %96 = vmatprep.subr.mxu0 0.0
    %97 = vmatpush1.msra.mxu0 0.0
    %98 = vmatprep.subr.mxu0 0.0
    %99 = vmatpush1.msra.mxu0 0.0
    %100 = vmatprep.subr.mxu0 0.0
    %101 = vmatpush1.msra.mxu0 %v57
    %102 = vmatprep.subr.mxu0 0.0
    %103 = vmatpush1.msra.mxu0 %v56
    %104 = vmatprep.subr.mxu0 0.0
    %105 = vmatpush2.msra.mxu0 0.0
    %106 = vmatprep.subr.mxu0 0.0
    %107 = vmatpush2.msra.mxu0 0.0
    %108 = vmatprep.subr.mxu0 0.0
    %109 = vmatpush2.msra.mxu0 0.0
    %110 = vmatprep.subr.mxu0 0.0
    %111 = vmatpush2.msra.mxu0 0.0
    %112 = vmatprep.subr.mxu0 0.0
    %113 = vmatpush2.msra.mxu0 0.0
    %114 = vmatprep.subr.mxu0 0.0
    %115 = vmatpush2.msra.mxu0 0.0
    %116 = vmatprep.subr.mxu0 0.0
    %117 = vmatpush2.msra.mxu0 0.0
    %118 = vmatprep.subr.mxu0 0.0
    %119 = vmatpush2.msra.mxu0 0.0
    %120 = vmatprep.subr.mxu0 0.0
    %121 = vmatpush2.msra.mxu0 0.0
    %122 = vmatprep.subr.mxu0 0.0
    %123 = vmatpush2.msra.mxu0 0.0
    %124 = vmatprep.subr.mxu0 0.0
    %125 = vmatpush2.msra.mxu0 0.0
    %126 = vmatprep.subr.mxu0 0.0
    %127 = vmatpush2.msra.mxu0 0.0
    %128 = vmatprep.subr.mxu0 0.0
    %129 = vmatpush2.msra.mxu0 0.0
    %130 = vmatprep.subr.mxu0 0.0
    %131 = vmatpush2.msra.mxu0 0.0
    %132 = vmatprep.subr.mxu0 0.0
    %133 = vmatpush2.msra.mxu0 0.0
    %134 = vmatprep.subr.mxu0 0.0
    %135 = vmatpush2.msra.mxu0 0.0
    %136 = vmatprep.mubr.f32.mxu0 0.0
    %137 = vmatmul.mubr.f32.gmra.mxu0 %v67
    %v138 = vpop.f32.mrf.mxu0
    %v139 = vadd.f32 %v63, %v138
    %v140 = vpop.f32.mrf.mxu0
    %141 = vmatprep.mubr.f32.mxu0 0.0
    %142 = vmatmul.mubr.f32.gmra.mxu0 %v70
    %v143 = vpop.f32.mrf.mxu0
    %v144 = vadd.f32 %v63, %v143
    %v145 = vpop.f32.mrf.mxu0
    %146 = vdwg.mxu0
    %v147 = vmax.f32 %v139, 0.0
    %v148 = vmax.f32 %v144, 0.0
    %v149 = vld [vmem:[#allocation2] sm:$0xff]
    %v150 = vld [vmem:[#allocation2 + $0x8] sm:$0xff]
    %v151 = vld [vmem:[#allocation2 + $0x10] sm:$0xff]
    %v152 = vld [vmem:[#allocation2 + $0x18] sm:$0xff]
    %v153 = vld [vmem:[#allocation2 + $0x20] sm:$0xff]
    %v154 = vld [vmem:[#allocation2 + $0x28] sm:$0xff]
    %v155 = vld [vmem:[#allocation2 + $0x30] sm:$0xff]
    %v156 = vld [vmem:[#allocation2 + $0x38] sm:$0xff]
    %v157 = vld [vmem:[#allocation2 + $0x40] sm:$0xff]
    %v158 = vld [vmem:[#allocation2 + $0x48] sm:$0xff]
    %v159 = vld [vmem:[#allocation2 + $0x50] sm:$0xff]
    %v160 = vld [vmem:[#allocation2 + $0x58] sm:$0xff]
    %v161 = vld [vmem:[#allocation2 + $0x60] sm:$0xff]
    %v162 = vld [vmem:[#allocation2 + $0x68] sm:$0xff]
    %v163 = vld [vmem:[#allocation2 + $0x70] sm:$0xff]
    %v164 = vld [vmem:[#allocation2 + $0x78] sm:$0xff]
    %v165 = vld [vmem:[%s4] sm:$0x1]
    %v167 = vlaneseq
    %v168 = vshrl.u32 %v167, 7
    %v169 = vsub.s32 0, %v168
    %v170 = vrot.slane %v165, %v169
    %172 = vmatprep.subr.mxu0 0.0
    %173 = vmatpush1.msra.mxu0 %v164
    %174 = vmatprep.subr.mxu0 0.0
    %175 = vmatpush1.msra.mxu0 %v163
    %176 = vmatprep.subr.mxu0 0.0
    %177 = vmatpush1.msra.mxu0 %v162
    %178 = vmatprep.subr.mxu0 0.0
    %179 = vmatpush1.msra.mxu0 %v161
    %180 = vmatprep.subr.mxu0 0.0
    %181 = vmatpush1.msra.mxu0 %v160
    %182 = vmatprep.subr.mxu0 0.0
    %183 = vmatpush1.msra.mxu0 %v159
    %184 = vmatprep.subr.mxu0 0.0
    %185 = vmatpush1.msra.mxu0 %v158
    %186 = vmatprep.subr.mxu0 0.0
    %187 = vmatpush1.msra.mxu0 %v157
    %188 = vmatprep.subr.mxu0 0.0
    %189 = vmatpush1.msra.mxu0 %v156
    %190 = vmatprep.subr.mxu0 0.0
    %191 = vmatpush1.msra.mxu0 %v155
    %192 = vmatprep.subr.mxu0 0.0
    %193 = vmatpush1.msra.mxu0 %v154
    %194 = vmatprep.subr.mxu0 0.0
    %195 = vmatpush1.msra.mxu0 %v153
    %196 = vmatprep.subr.mxu0 0.0
    %197 = vmatpush1.msra.mxu0 %v152
    %198 = vmatprep.subr.mxu0 0.0
    %199 = vmatpush1.msra.mxu0 %v151
    %200 = vmatprep.subr.mxu0 0.0
    %201 = vmatpush1.msra.mxu0 %v150
    %202 = vmatprep.subr.mxu0 0.0
    %203 = vmatpush1.msra.mxu0 %v149
    %204 = vmatprep.subr.mxu0 0.0
    %205 = vmatpush2.msra.mxu0 0.0
    %206 = vmatprep.subr.mxu0 0.0
    %207 = vmatpush2.msra.mxu0 0.0
    %208 = vmatprep.subr.mxu0 0.0
    %209 = vmatpush2.msra.mxu0 0.0
    %210 = vmatprep.subr.mxu0 0.0
    %211 = vmatpush2.msra.mxu0 0.0
    %212 = vmatprep.subr.mxu0 0.0
    %213 = vmatpush2.msra.mxu0 0.0
    %214 = vmatprep.subr.mxu0 0.0
    %215 = vmatpush2.msra.mxu0 0.0
    %216 = vmatprep.subr.mxu0 0.0
    %217 = vmatpush2.msra.mxu0 0.0
    %218 = vmatprep.subr.mxu0 0.0
    %219 = vmatpush2.msra.mxu0 0.0
    %220 = vmatprep.subr.mxu0 0.0
    %221 = vmatpush2.msra.mxu0 0.0
    %222 = vmatprep.subr.mxu0 0.0
    %223 = vmatpush2.msra.mxu0 0.0
    %224 = vmatprep.subr.mxu0 0.0
    %225 = vmatpush2.msra.mxu0 0.0
    %226 = vmatprep.subr.mxu0 0.0
    %227 = vmatpush2.msra.mxu0 0.0
    %228 = vmatprep.subr.mxu0 0.0
    %229 = vmatpush2.msra.mxu0 0.0
    %230 = vmatprep.subr.mxu0 0.0
    %231 = vmatpush2.msra.mxu0 0.0
    %232 = vmatprep.subr.mxu0 0.0
    %233 = vmatpush2.msra.mxu0 0.0
    %234 = vmatprep.subr.mxu0 0.0
    %235 = vmatpush2.msra.mxu0 0.0
    %236 = vmatprep.mubr.f32.mxu0 0.0
    %237 = vmatmul.mubr.f32.gmra.mxu0 %v147
    %v238 = vpop.f32.mrf.mxu0
    %v239 = vadd.f32 %v170, %v238
    %v240 = vpop.f32.mrf.mxu0
    %241 = vmatprep.mubr.f32.mxu0 0.0
    %242 = vmatmul.mubr.f32.gmra.mxu0 %v148
    %v243 = vpop.f32.mrf.mxu0
    %v244 = vadd.f32 %v170, %v243
    %v245 = vpop.f32.mrf.mxu0
    %246 = vdwg.mxu0
    %v247 = vmax.f32 %v239, 0.0
    %v248 = vmax.f32 %v244, 0.0
    %v249 = vld [vmem:[#allocation4] sm:$0xff]
    %v250 = vld [vmem:[#allocation4 + $0x8] sm:$0xff]
    %v251 = vld [vmem:[#allocation4 + $0x10] sm:$0xff]
    %v252 = vld [vmem:[#allocation4 + $0x18] sm:$0xff]
    %v253 = vld [vmem:[#allocation4 + $0x20] sm:$0xff]
    %v254 = vld [vmem:[#allocation4 + $0x28] sm:$0xff]
    %v255 = vld [vmem:[#allocation4 + $0x30] sm:$0xff]
    %v256 = vld [vmem:[#allocation4 + $0x38] sm:$0xff]
    %v257 = vld [vmem:[#allocation4 + $0x40] sm:$0xff]
    %v258 = vld [vmem:[#allocation4 + $0x48] sm:$0xff]
    %v259 = vld [vmem:[#allocation4 + $0x50] sm:$0xff]
    %v260 = vld [vmem:[#allocation4 + $0x58] sm:$0xff]
    %v261 = vld [vmem:[#allocation4 + $0x60] sm:$0xff]
    %v262 = vld [vmem:[#allocation4 + $0x68] sm:$0xff]
    %v263 = vld [vmem:[#allocation4 + $0x70] sm:$0xff]
    %v264 = vld [vmem:[#allocation4 + $0x78] sm:$0xff]
    %v265 = vld [vmem:[%s6] sm:$0x1]
    %v267 = vlaneseq
    %v268 = vshrl.u32 %v267, 7
    %v269 = vsub.s32 0, %v268
    %v270 = vrot.slane %v265, %v269
    %272 = vmatprep.subr.mxu0 0.0
    %273 = vmatpush1.msra.mxu0 %v264
    %274 = vmatprep.subr.mxu0 0.0
    %275 = vmatpush1.msra.mxu0 %v263
    %276 = vmatprep.subr.mxu0 0.0
    %277 = vmatpush1.msra.mxu0 %v262
    %278 = vmatprep.subr.mxu0 0.0
    %279 = vmatpush1.msra.mxu0 %v261
    %280 = vmatprep.subr.mxu0 0.0
    %281 = vmatpush1.msra.mxu0 %v260
    %282 = vmatprep.subr.mxu0 0.0
    %283 = vmatpush1.msra.mxu0 %v259
    %284 = vmatprep.subr.mxu0 0.0
    %285 = vmatpush1.msra.mxu0 %v258
    %286 = vmatprep.subr.mxu0 0.0
    %287 = vmatpush1.msra.mxu0 %v257
    %288 = vmatprep.subr.mxu0 0.0
    %289 = vmatpush1.msra.mxu0 %v256
    %290 = vmatprep.subr.mxu0 0.0
    %291 = vmatpush1.msra.mxu0 %v255
    %292 = vmatprep.subr.mxu0 0.0
    %293 = vmatpush1.msra.mxu0 %v254
    %294 = vmatprep.subr.mxu0 0.0
    %295 = vmatpush1.msra.mxu0 %v253
    %296 = vmatprep.subr.mxu0 0.0
    %297 = vmatpush1.msra.mxu0 %v252
    %298 = vmatprep.subr.mxu0 0.0
    %299 = vmatpush1.msra.mxu0 %v251
    %300 = vmatprep.subr.mxu0 0.0
    %301 = vmatpush1.msra.mxu0 %v250
    %302 = vmatprep.subr.mxu0 0.0
    %303 = vmatpush1.msra.mxu0 %v249
    %304 = vmatprep.subr.mxu0 0.0
    %305 = vmatpush2.msra.mxu0 0.0
    %306 = vmatprep.subr.mxu0 0.0
    %307 = vmatpush2.msra.mxu0 0.0
    %308 = vmatprep.subr.mxu0 0.0
    %309 = vmatpush2.msra.mxu0 0.0
    %310 = vmatprep.subr.mxu0 0.0
    %311 = vmatpush2.msra.mxu0 0.0
    %312 = vmatprep.subr.mxu0 0.0
    %313 = vmatpush2.msra.mxu0 0.0
    %314 = vmatprep.subr.mxu0 0.0
    %315 = vmatpush2.msra.mxu0 0.0
    %316 = vmatprep.subr.mxu0 0.0
    %317 = vmatpush2.msra.mxu0 0.0
    %318 = vmatprep.subr.mxu0 0.0
    %319 = vmatpush2.msra.mxu0 0.0
    %320 = vmatprep.subr.mxu0 0.0
    %321 = vmatpush2.msra.mxu0 0.0
    %322 = vmatprep.subr.mxu0 0.0
    %323 = vmatpush2.msra.mxu0 0.0
    %324 = vmatprep.subr.mxu0 0.0
    %325 = vmatpush2.msra.mxu0 0.0
    %326 = vmatprep.subr.mxu0 0.0
    %327 = vmatpush2.msra.mxu0 0.0
    %328 = vmatprep.subr.mxu0 0.0
    %329 = vmatpush2.msra.mxu0 0.0
    %330 = vmatprep.subr.mxu0 0.0
    %331 = vmatpush2.msra.mxu0 0.0
    %332 = vmatprep.subr.mxu0 0.0
    %333 = vmatpush2.msra.mxu0 0.0
    %334 = vmatprep.subr.mxu0 0.0
    %335 = vmatpush2.msra.mxu0 0.0
    %336 = vmatprep.mubr.f32.mxu0 0.0
    %337 = vmatmul.mubr.f32.gmra.mxu0 %v247
    %v338 = vpop.f32.mrf.mxu0
    %v339 = vadd.f32 %v270, %v338
    %v340 = vpop.f32.mrf.mxu0
    %341 = vmatprep.mubr.f32.mxu0 0.0
    %342 = vmatmul.mubr.f32.gmra.mxu0 %v248
    %v343 = vpop.f32.mrf.mxu0
    %v344 = vadd.f32 %v270, %v343
    %v345 = vpop.f32.mrf.mxu0
    %346 = vdwg.mxu0
    %347 = vst [vmem:[%s7] sm:$0xff] %v339
    %348 = vst [vmem:[%s7 + $0x8] sm:$0xff] %v344
    // Predicated region
    $region38: #{deep_neural_net_forward.1} parent=1 // pred_check
      _
    $region39: #{deep_neural_net_forward.1} parent=1 // pred_check_branch
      %350 = sbr.rel (0) target = $region41
    $region40: #{deep_neural_net_forward.1} parent=1 // pred_region
      _
    $region41: #{deep_neural_net_forward.1} parent=1 // pred_fallthru
      _
    // Predicated region
    $region42: #{deep_neural_net_forward.1} parent=1 // pred_check
      _
    $region43: #{deep_neural_net_forward.1} parent=1 // pred_check_branch
      %352 = sbr.rel (0) target = $region45
    $region44: #{deep_neural_net_forward.1} parent=1 // pred_region
      _
    $region45: #{deep_neural_net_forward.1} parent=1 // pred_fallthru
      _
    %353 = vsyncpa [#allocation3], 1
    %354 = vsyncpa [#allocation5], 1

</llo_original>
